<compile_context>
chip_gen: v6e
topology: v6e:2x2x1
jax: 0.10.0
libtpu: 0.0.40
codegen_flags: <defaults>
</compile_context>

<pallas_src>
import jax
import jax.numpy as jnp
from jax.experimental import pallas as pl
from jax.experimental.pallas import tpu as pltpu

STRIDE = 4  # synthetic backbone total stride (kernel == stride == 4)


def _round_up(x, m):
    return ((x + m - 1) // m) * m


def _conv_matmul_kernel(p_ref, w_ref, b_ref, o_ref, acc_ref):
    # Tiled o = relu(patches @ w + b): bf16 MXU matmul, f32 accumulation in a
    # VMEM scratch that lives across the K grid axis; bias+ReLU on the VPU at
    # the last K step only.
    k = pl.program_id(2)

    @pl.when(k == 0)
    def _():
        acc_ref[...] = jnp.zeros_like(acc_ref)

    acc_ref[...] += jnp.dot(p_ref[...], w_ref[...],
                            preferred_element_type=jnp.float32)

    @pl.when(k == pl.num_programs(2) - 1)
    def _():
        o_ref[...] = jnp.maximum(acc_ref[...] + b_ref[...],
                                 0.0).astype(o_ref.dtype)


def _conv_matmul_kernel_k1(p_ref, w_ref, b_ref, o_ref):
    # Fast path: whole K reduction fits one tile -> no accumulator RMW.
    o_ref[...] = jnp.maximum(
        jnp.dot(p_ref[...], w_ref[...], preferred_element_type=jnp.float32)
        + b_ref[...], 0.0).astype(o_ref.dtype)


def conv_patch_matmul(patches, w_mat, bias, *, tm=512, tn=512, tk=512,
                      out_dtype=jnp.float32):
    """ReLU(patches @ w_mat + bias), tiled over (M, N, K).

    patches: [M, K]  w_mat: [K, N]  bias: [N]
    Operands are cast to bf16 (no-op if already bf16) and zero-padded to tile
    multiples with a single jnp.pad; the result is out_dtype, sliced to [M,N].
    Zero padding along K is REQUIRED for the reduction to be correct.
    """
    M, K = patches.shape
    K2, N = w_mat.shape
    assert K == K2

    # Clamp tiles for small shapes so tiny demos do not pad wastefully;
    # real backbone shapes use the full 512/512/512 tiles.
    tm = min(tm, _round_up(M, 8))
    tn = min(tn, _round_up(N, 128))
    tk = min(tk, _round_up(K, 128))

    Mp, Np, Kp = _round_up(M, tm), _round_up(N, tn), _round_up(K, tk)

    # Single fused pad per operand (bf16 operands, f32 bias / accumulation).
    p = jnp.pad(patches.astype(jnp.bfloat16), ((0, Mp - M), (0, Kp - K)))
    w = jnp.pad(w_mat.astype(jnp.bfloat16), ((0, Kp - K), (0, Np - N)))
    b = jnp.pad(bias.reshape(1, -1).astype(jnp.float32),
                ((0, 0), (0, Np - N)))

    grid_k = Kp // tk
    grid = (Mp // tm, Np // tn, grid_k)
    flops = 2 * Mp * Np * Kp
    bytes_accessed = (p.size * 2 + w.size * 2 + b.size * 4
                      + Mp * Np * jnp.dtype(out_dtype).itemsize)

    if grid_k == 1:
        kernel = _conv_matmul_kernel_k1
        scratch = []
    else:
        kernel = _conv_matmul_kernel
        scratch = [pltpu.VMEM((tm, tn), jnp.float32)]

    # TODO(synk): if profiling shows exposed DMA on the weight stream, add
    # pipeline_mode=pl.Buffered(3) to the (tk, tn) weight BlockSpec.
    out = pl.pallas_call(
        kernel,
        out_shape=jax.ShapeDtypeStruct((Mp, Np), out_dtype),
        grid_spec=pltpu.PrefetchScalarGridSpec(
            num_scalar_prefetch=0,
            grid=grid,
            in_specs=[
                pl.BlockSpec((tm, tk), lambda i, j, k: (i, k)),
                pl.BlockSpec((tk, tn), lambda i, j, k: (k, j)),
                pl.BlockSpec((1, tn), lambda i, j, k: (0, j)),
            ],
            out_specs=pl.BlockSpec((tm, tn), lambda i, j, k: (i, j)),
            scratch_shapes=scratch,
        ),
        compiler_params=pltpu.CompilerParams(
            dimension_semantics=("parallel", "parallel", "arbitrary"),
            vmem_limit_bytes=48 * 1024 * 1024,  # <= v7x 64 MiB physical VMEM
        ),
        cost_estimate=pl.CostEstimate(
            flops=flops, transcendentals=0, bytes_accessed=bytes_accessed),
    )(p, w, b)
    return out[:M, :N]


def backbone_layer4(x_nchw, w_conv, b_conv):
    """Synthetic 'layer4': Conv2d(C_in, C_out, kernel=4, stride=4) + ReLU.

    x_nchw: [B, C_in, H, W]  (PyTorch NCHW)
    w_conv: [C_out, C_in, 4, 4]  (PyTorch conv weight layout)
    returns: [B, C_out, H/4, W/4]  (NCHW, to match the PyTorch module)
    """
    B, C, H, W = x_nchw.shape
    Hp, Wp = H // STRIDE, W // STRIDE
    # Cast to bf16 BEFORE im2col so the transpose pass moves half the bytes.
    x = x_nchw.astype(jnp.bfloat16)
    # im2col for stride == kernel, built DIRECTLY from NCHW (single transpose
    # pass of the activation).  Patch element order is (C, kh, kw), matching
    # PyTorch's weight flatten, so the weight only needs a cheap reshape + T.
    x = x.reshape(B, C, Hp, STRIDE, Wp, STRIDE)
    x = jnp.transpose(x, (0, 2, 4, 1, 3, 5))                  # B,Hp,Wp,C,kh,kw
    patches = x.reshape(B * Hp * Wp, C * STRIDE * STRIDE)     # [M, K] bf16
    w_mat = w_conv.astype(jnp.bfloat16).reshape(
        w_conv.shape[0], -1).T                                 # [K, C_out] bf16
    y = conv_patch_matmul(patches, w_mat, b_conv)             # [M, C_out] f32
    y = y.reshape(B, Hp, Wp, -1)                              # NHWC (lane-friendly)
    # TODO(synk): keep NHWC (and optionally bf16) if the downstream DETR
    # projection conv allows; NCHW f32 is kept only to preserve the PyTorch
    # module boundary (one extra HBM pass over the feature map).
    return jnp.transpose(y, (0, 3, 1, 2))


def backbone_base_forward(tensors, mask, params):
    """BackboneBase.forward on a NestedTensor (tensors, mask).

    Returns {name: (feature NCHW, bool mask [B, H', W'])}, mirroring
    {name: NestedTensor(x, mask)} with return_interm_layers=False.
    """
    xs = {'0': backbone_layer4(tensors, params['w'], params['b'])}
    out = {}
    H, W = mask.shape[-2:]
    for name, x in xs.items():
        Hp, Wp = x.shape[-2:]
        # F.interpolate(m[None].float(), size=(Hp, Wp)) default mode='nearest':
        # src_idx = floor(dst_idx * in/out). Pure indexing -> JAX glue.
        ri = (jnp.arange(Hp) * H) // Hp
        ci = (jnp.arange(Wp) * W) // Wp
        m = mask[:, ri][:, :, ci].astype(jnp.bool_)
        out[name] = (x, m)
    return out


if __name__ == "__main__":
    key = jax.random.PRNGKey(0)
    k_x, k_w, k_b = jax.random.split(key, 3)

    B, C_in, H, W = 2, 4, 16, 16
    num_channels = 32

    # NestedTensor pieces: image tensors (NCHW) and a padding mask [B, H, W]
    x = jax.random.normal(k_x, (B, C_in, H, W), dtype=jnp.float32)
    col = jnp.arange(W)
    mask = jnp.broadcast_to(col >= W - 3, (B, H, W))               # bool

    # Deterministic synthetic "layer4" parameters (C_in -> num_channels, k=s=4)
    w = jax.random.normal(k_w, (num_channels, C_in, STRIDE, STRIDE),
                          dtype=jnp.float32) * 0.05
    b = jax.random.normal(k_b, (num_channels,), dtype=jnp.float32) * 0.05

    out = backbone_base_forward(x, mask, {'w': w, 'b': b})
    feat, m_out = out['0']
    jax.block_until_ready(feat)
    jax.block_until_ready(m_out)

    assert feat.shape == (B, num_channels, H // STRIDE, W // STRIDE)
    assert feat.dtype == jnp.float32
    assert m_out.shape == (B, H // STRIDE, W // STRIDE)
    assert m_out.dtype == jnp.bool_

    # Pure-JAX reference (f32) for correctness; loose tolerance for bf16 MXU
    # operand rounding (gap widens slightly with real K in the thousands).
    Hp, Wp = H // STRIDE, W // STRIDE
    xp = x.reshape(B, C_in, Hp, STRIDE, Wp, STRIDE)
    xp = jnp.transpose(xp, (0, 2, 4, 1, 3, 5)).reshape(B * Hp * Wp, -1)
    ref = jnp.maximum(xp @ w.reshape(num_channels, -1).T + b[None, :], 0.0)
    ref = jnp.transpose(ref.reshape(B, Hp, Wp, num_channels), (0, 3, 1, 2))
    assert jnp.allclose(feat, ref, atol=5e-2, rtol=5e-2)

    print("KERNEL_OK")
</pallas_src>

<mosaic_0001>
module attributes {stable_mosaic.version = 11 : i64} {
  func.func @_conv_matmul_kernel_k1(%arg0: i32, %arg1: i32, %arg2: i32, %arg3: memref<32x128xbf16, #tpu.memory_space<vmem>>, %arg4: memref<128x128xbf16, #tpu.memory_space<vmem>>, %arg5: memref<1x128xf32, #tpu.memory_space<vmem>>, %arg6: memref<32x128xf32, #tpu.memory_space<vmem>>) attributes {dimension_semantics = [#tpu.dimension_semantics<parallel>, #tpu.dimension_semantics<parallel>, #tpu.dimension_semantics<arbitrary>], iteration_bounds = array<i64: 1, 1, 1>, scalar_prefetch = 0 : i64, scratch_operands = 0 : i64, tpu.core_type = #tpu.core_type<tc>, window_params = [{transform_indices = @transform_0, window_bounds = array<i64: 32, 128>}, {transform_indices = @transform_1, window_bounds = array<i64: 128, 128>}, {transform_indices = @transform_2, window_bounds = array<i64: 1, 128>}, {transform_indices = @transform_3, window_bounds = array<i64: 32, 128>}]} {
    %c0 = arith.constant 0 : index
    %c0_0 = arith.constant 0 : index
    %0 = vector.load %arg3[%c0, %c0_0] : memref<32x128xbf16, #tpu.memory_space<vmem>>, vector<32x128xbf16>
    %c0_1 = arith.constant 0 : index
    %c0_2 = arith.constant 0 : index
    %1 = vector.load %arg4[%c0_1, %c0_2] : memref<128x128xbf16, #tpu.memory_space<vmem>>, vector<128x128xbf16>
    %cst = arith.constant dense<0.000000e+00> : vector<32x128xf32>
    %2 = tpu.matmul %0, %1, %cst {dimension_numbers = #tpu.dot_dimension_numbers<[1], [0], [0], [1], [0, 0, 1, 1], [], []>} : vector<32x128xbf16>, vector<128x128xbf16>, vector<32x128xf32> -> vector<32x128xf32>
    %c0_3 = arith.constant 0 : index
    %c0_4 = arith.constant 0 : index
    %3 = vector.load %arg5[%c0_3, %c0_4] : memref<1x128xf32, #tpu.memory_space<vmem>>, vector<1x128xf32>
    %4 = vector.broadcast %3 : vector<1x128xf32> to vector<32x128xf32>
    %5 = arith.addf %2, %4 : vector<32x128xf32>
    %cst_5 = arith.constant 0.000000e+00 : f32
    %6 = vector.broadcast %cst_5 : f32 to vector<32x128xf32>
    %7 = arith.maximumf %5, %6 : vector<32x128xf32>
    %c0_6 = arith.constant 0 : index
    %c0_7 = arith.constant 0 : index
    %8 = vector.load %arg6[%c0_6, %c0_7] : memref<32x128xf32, #tpu.memory_space<vmem>>, vector<32x128xf32>
    tpu.vector_store %arg6[%c0_6, %c0_7], %7 {strides = array<i32>} : memref<32x128xf32, #tpu.memory_space<vmem>>, vector<32x128xf32>,
    return
  }
  func.func @transform_0(%arg0: i32, %arg1: i32, %arg2: i32) -> (i32, i32) {
    %c0_i32 = arith.constant 0 : i32
    return %arg0, %arg2 : i32, i32
  }
  func.func @transform_1(%arg0: i32, %arg1: i32, %arg2: i32) -> (i32, i32) {
    %c0_i32 = arith.constant 0 : i32
    return %arg2, %arg1 : i32, i32
  }
  func.func @transform_2(%arg0: i32, %arg1: i32, %arg2: i32) -> (i32, i32) {
    %c0_i32 = arith.constant 0 : i32
    %c0_i32_0 = arith.constant 0 : i32
    return %c0_i32, %arg1 : i32, i32
  }
  func.func @transform_3(%arg0: i32, %arg1: i32, %arg2: i32) -> (i32, i32) {
    %c0_i32 = arith.constant 0 : i32
    return %arg0, %arg1 : i32, i32
  }
}

</mosaic_0001>

<llo_original>
// kernel: tpu_custom_call.1
$region0: #{tpu_custom_call.1}
  #allocation0 [shape = 'u32[]', space=smem, size = 0x4, offset = 0x4, fixed_abs, tag = 'smem constant byte address 0x4 - core index']
  #allocation1 [shape = 'u32[144,128]{1,0:T(1,128)}', space=vmem, size = 0x12000, scoped, tag = 'internal scratch']
  %s0 = inlined_call_operand.hbm [shape: bf16[32,128], index: 0, kind: input, shape index: {}]
  %s1 = inlined_call_operand.hbm [shape: bf16[128,128], index: 1, kind: input, shape index: {}]
  %s2 = inlined_call_operand.vmem [shape: f32[1,128], index: 2, kind: input, shape index: {}]
  %s3 = inlined_call_operand.hbm [shape: f32[32,128], index: 3, kind: output, shape index: {}]
  %s4 = sld [smem:[#allocation0]]
  $region30: #{tpu_custom_call.1} parent=0
    _
  %s6 = ssub.s32 1, %s4
  %s7 = scalar_select 0, %s6, %s4
  $region1: #{tpu_custom_call.1} parent=0
    #allocation2 [shape = 'u8[8192]{0}', space=vmem, size = 0x2000, scoped, tag = 'input window, operand 0, single buffered']
    #allocation3 [shape = 's32[1]{0}', space=sflag, size = 0x4, scoped, tag = 'scoped memory for tpu_custom_call.1']
    #allocation4 [shape = 's32[1]{0}', space=sflag, size = 0x4, scoped, tag = 'scoped memory for tpu_custom_call.1']
    #allocation5 [shape = 'u8[32768]{0}', space=vmem, size = 0x8000, scoped, tag = 'input window, operand 1, single buffered']
    #allocation6 [shape = 's32[1]{0}', space=sflag, size = 0x4, scoped, tag = 'scoped memory for tpu_custom_call.1']
    #allocation7 [shape = 'u8[16384]{0}', space=vmem, size = 0x4000, scoped, tag = 'output window, operand 0, single buffered']
    %8 = vsyncpa [#allocation3], 0
    %9 = vsyncpa [#allocation6], 0
    %10 = vsyncpa [#allocation4], 0
    // Predicated region
    $region2: #{tpu_custom_call.1} parent=1 // pred_check
      _
    $region3: #{tpu_custom_call.1} parent=1 // pred_check_branch
      %12 = sbr.rel (0) target = $region5
    $region4: #{tpu_custom_call.1} parent=1 // pred_region
      %s14 = ssub.s32 256, 256
      %15 = vsyncadd [#allocation3], %s14
      %s16 = sshll.u32 [#allocation2], 4
      %s17 = int_to_ptr.vmem [resolvable:$true] %s16
      %22 = dma.hbm_to_vmem [thread:$0]  %s0, 256, %s17, [#allocation3], 64, 64, 4
    $region5: #{tpu_custom_call.1} parent=1 // pred_fallthru
      _
    // Predicated region
    $region6: #{tpu_custom_call.1} parent=1 // pred_check
      _
    $region7: #{tpu_custom_call.1} parent=1 // pred_check_branch
      %24 = sbr.rel (0) target = $region9
    $region8: #{tpu_custom_call.1} parent=1 // pred_region
      %s26 = ssub.s32 1024, 1024
      %27 = vsyncadd [#allocation6], %s26
      %s28 = sshll.u32 [#allocation5], 4
      %s29 = int_to_ptr.vmem [resolvable:$true] %s28
      %34 = dma.hbm_to_vmem [thread:$0]  %s1, 1024, %s29, [#allocation6], 64, 64, 4
    $region9: #{tpu_custom_call.1} parent=1 // pred_fallthru
      _
    // Predicated region
    $region10: #{tpu_custom_call.1} parent=1 // pred_check
      _
    $region11: #{tpu_custom_call.1} parent=1 // pred_check_branch
      %36 = sbr.rel (0) target = $region13
    $region12: #{tpu_custom_call.1} parent=1 // pred_region
      _
    $region13: #{tpu_custom_call.1} parent=1 // pred_fallthru
      _
    // Predicated region
    $region14: #{tpu_custom_call.1} parent=1 // pred_check
      _
    $region15: #{tpu_custom_call.1} parent=1 // pred_check_branch
      %38 = sbr.rel (0) target = $region17
    $region16: #{tpu_custom_call.1} parent=1 // pred_region
      %39 = dma.done [#allocation3], 256
    $region17: #{tpu_custom_call.1} parent=1 // pred_fallthru
      _
    // Predicated region
    $region18: #{tpu_custom_call.1} parent=1 // pred_check
      _
    $region19: #{tpu_custom_call.1} parent=1 // pred_check_branch
      %41 = sbr.rel (0) target = $region21
    $region20: #{tpu_custom_call.1} parent=1 // pred_region
      %42 = dma.done [#allocation6], 1024
    $region21: #{tpu_custom_call.1} parent=1 // pred_fallthru
      _
    %v44 = vld [vmem:[#allocation2] sm:$0xf]
    %v45 = vld [vmem:[#allocation2 + $0x4] sm:$0xf]
    %v46 = vld [vmem:[#allocation2 + $0x8] sm:$0xf]
    %v47 = vld [vmem:[#allocation2 + $0xc] sm:$0xf]
    %v48 = vld [vmem:[#allocation5] sm:$0xf]
    %v49 = vld [vmem:[#allocation5 + $0x4] sm:$0xf]
    %v50 = vld [vmem:[#allocation5 + $0x8] sm:$0xf]
    %v51 = vld [vmem:[#allocation5 + $0xc] sm:$0xf]
    %v52 = vld [vmem:[#allocation5 + $0x10] sm:$0xf]
    %v53 = vld [vmem:[#allocation5 + $0x14] sm:$0xf]
    %v54 = vld [vmem:[#allocation5 + $0x18] sm:$0xf]
    %v55 = vld [vmem:[#allocation5 + $0x1c] sm:$0xf]
    %v56 = vld [vmem:[#allocation5 + $0x20] sm:$0xf]
    %v57 = vld [vmem:[#allocation5 + $0x24] sm:$0xf]
    %v58 = vld [vmem:[#allocation5 + $0x28] sm:$0xf]
    %v59 = vld [vmem:[#allocation5 + $0x2c] sm:$0xf]
    %v60 = vld [vmem:[#allocation5 + $0x30] sm:$0xf]
    %v61 = vld [vmem:[#allocation5 + $0x34] sm:$0xf]
    %v62 = vld [vmem:[#allocation5 + $0x38] sm:$0xf]
    %v63 = vld [vmem:[#allocation5 + $0x3c] sm:$0xf]
    %v64 = vld [vmem:[%s2] sm:$0x1]
    %v66 = vlaneseq
    %v67 = vshrl.u32 %v66, 7
    %v68 = vsub.s32 0, %v67
    %v69 = vrot.slane %v64, %v68
    %v75 = vunpack.c.l.b16 %v44
    %v76 = vunpack.c.l.b16 %v45
    %v77 = vunpack.c.l.b16 %v46
    %v78 = vunpack.c.l.b16 %v47
    %v79 = vpack.c.b16 %v76, %v75
    %v80 = vpack.c.b16 %v78, %v77
    %v99 = vunpack.c.l.b16 %v48
    %v100 = vunpack.c.l.b16 %v49
    %v101 = vunpack.c.l.b16 %v50
    %v102 = vunpack.c.l.b16 %v51
    %v103 = vunpack.c.l.b16 %v52
    %v104 = vunpack.c.l.b16 %v53
    %v105 = vunpack.c.l.b16 %v54
    %v106 = vunpack.c.l.b16 %v55
    %v107 = vunpack.c.l.b16 %v56
    %v108 = vunpack.c.l.b16 %v57
    %v109 = vunpack.c.l.b16 %v58
    %v110 = vunpack.c.l.b16 %v59
    %v111 = vunpack.c.l.b16 %v60
    %v112 = vunpack.c.l.b16 %v61
    %v113 = vunpack.c.l.b16 %v62
    %v114 = vunpack.c.l.b16 %v63
    %v115 = vpack.c.b16 %v100, %v99
    %v116 = vpack.c.b16 %v102, %v101
    %v117 = vpack.c.b16 %v104, %v103
    %v118 = vpack.c.b16 %v106, %v105
    %v119 = vpack.c.b16 %v108, %v107
    %v120 = vpack.c.b16 %v110, %v109
    %v121 = vpack.c.b16 %v112, %v111
    %v122 = vpack.c.b16 %v114, %v113
    %131 = vmatprep.subr.bf16.mxu0 0
    %132 = vmatpush1.bf16.msra.mxu0 %v122
    %133 = vmatprep.subr.bf16.mxu0 0
    %134 = vmatpush1.bf16.msra.mxu0 %v121
    %135 = vmatprep.subr.bf16.mxu0 0
    %136 = vmatpush1.bf16.msra.mxu0 %v120
    %137 = vmatprep.subr.bf16.mxu0 0
    %138 = vmatpush1.bf16.msra.mxu0 %v119
    %139 = vmatprep.subr.bf16.mxu0 0
    %140 = vmatpush1.bf16.msra.mxu0 %v118
    %141 = vmatprep.subr.bf16.mxu0 0
    %142 = vmatpush1.bf16.msra.mxu0 %v117
    %143 = vmatprep.subr.bf16.mxu0 0
    %144 = vmatpush1.bf16.msra.mxu0 %v116
    %145 = vmatprep.subr.bf16.mxu0 0
    %146 = vmatpush1.bf16.msra.mxu0 %v115
    %147 = vmatprep.subr.bf16.mxu0 0
    %148 = vmatpush2.bf16.msra.mxu0 0
    %149 = vmatprep.subr.bf16.mxu0 0
    %150 = vmatpush2.bf16.msra.mxu0 0
    %151 = vmatprep.subr.bf16.mxu0 0
    %152 = vmatpush2.bf16.msra.mxu0 0
    %153 = vmatprep.subr.bf16.mxu0 0
    %154 = vmatpush2.bf16.msra.mxu0 0
    %155 = vmatprep.subr.bf16.mxu0 0
    %156 = vmatpush2.bf16.msra.mxu0 0
    %157 = vmatprep.subr.bf16.mxu0 0
    %158 = vmatpush2.bf16.msra.mxu0 0
    %159 = vmatprep.subr.bf16.mxu0 0
    %160 = vmatpush2.bf16.msra.mxu0 0
    %161 = vmatprep.subr.bf16.mxu0 0
    %162 = vmatpush2.bf16.msra.mxu0 0
    %163 = vmatprep.mubr.bf16.mxu0 0
    %164 = vmatmul.mubr.bf16.gmra.mxu0 %v79
    %v165 = vpop.f32.mrf.mxu0
    %v166 = vadd.f32 %v69, %v165
    %v167 = vpop.f32.mrf.mxu0
    %v168 = vpop.f32.mrf.mxu0
    %v169 = vadd.f32 %v69, %v168
    %v170 = vpop.f32.mrf.mxu0
    %171 = vmatprep.mubr.bf16.mxu0 0
    %172 = vmatmul.mubr.bf16.gmra.mxu0 %v80
    %v173 = vpop.f32.mrf.mxu0
    %v174 = vadd.f32 %v69, %v173
    %v175 = vpop.f32.mrf.mxu0
    %v176 = vpop.f32.mrf.mxu0
    %v177 = vadd.f32 %v69, %v176
    %v178 = vpop.f32.mrf.mxu0
    %179 = vdwg.mxu0
    %v180 = vmax.f32 %v166, 0.0
    %v181 = vmax.f32 %v169, 0.0
    %v182 = vmax.f32 %v174, 0.0
    %v183 = vmax.f32 %v177, 0.0
    %184 = vst [vmem:[#allocation7] sm:$0xff] %v180
    %185 = vst [vmem:[#allocation7 + $0x8] sm:$0xff] %v181
    %186 = vst [vmem:[#allocation7 + $0x10] sm:$0xff] %v182
    %187 = vst [vmem:[#allocation7 + $0x18] sm:$0xff] %v183
    // Predicated region
    $region22: #{tpu_custom_call.1} parent=1 // pred_check
      _
    $region23: #{tpu_custom_call.1} parent=1 // pred_check_branch
      %189 = sbr.rel (0) target = $region25
    $region24: #{tpu_custom_call.1} parent=1 // pred_region
      %s191 = ssub.s32 512, 512
      %192 = vsyncadd [#allocation4], %s191
      %s193 = sshll.u32 [#allocation7], 4
      %s194 = int_to_ptr.vmem [resolvable:$true] %s193
      %199 = dma.vmem_to_hbm [thread:$0]  %s194, 512, %s3, [#allocation4], 128, 128, 8
    $region25: #{tpu_custom_call.1} parent=1 // pred_fallthru
      _
    // Predicated region
    $region26: #{tpu_custom_call.1} parent=1 // pred_check
      _
    $region27: #{tpu_custom_call.1} parent=1 // pred_check_branch
      %201 = sbr.rel (0) target = $region29
    $region28: #{tpu_custom_call.1} parent=1 // pred_region
      %202 = dma.done [#allocation4], 512
    $region29: #{tpu_custom_call.1} parent=1 // pred_fallthru
      _
    %203 = vsyncpa [#allocation3], 1
    %204 = vsyncpa [#allocation6], 1
    %205 = vsyncpa [#allocation4], 1

</llo_original>
